<compile_context>
chip_gen: v6e
topology: v6e:2x2x1
jax: 0.10.0
libtpu: 0.0.40
codegen_flags: <defaults>
</compile_context>

<pallas_src>
import functools

import numpy as np
import jax
import jax.numpy as jnp
from jax import lax
from jax.experimental import pallas as pl
from jax.experimental.pallas import tpu as pltpu


# ----------------------------------------------------------------------------
# Circular left shift along the last (lane) axis:  out[..., p] = x[..., (p+k) % n]
# ----------------------------------------------------------------------------
def _lshift_concat(x, k):
    return jnp.concatenate([x[..., k:], x[..., :k]], axis=-1)


_ROLL_MODE_CACHE = {}


def _detect_roll_mode(rows, n, dtype):
    """One-time probe: can pltpu.roll express a circular left shift on a (rows, n)
    array of `dtype`, and with which shift convention?  Returns 'neg' (jnp.roll
    convention: left-shift-by-k == roll(x, n-k)), 'pos' (reversed), or 'concat'."""
    key = (rows, n, jnp.dtype(dtype).name)
    if key in _ROLL_MODE_CACHE:
        return _ROLL_MODE_CACHE[key]

    def probe_kernel(x_ref, o_ref):
        o_ref[...] = pltpu.roll(x_ref[...], n - 1, axis=-1)

    mode = "concat"
    try:
        with jax.ensure_compile_time_eval():
            x = jnp.broadcast_to(jnp.arange(n, dtype=jnp.float32), (rows, n)).astype(dtype)
            out = pl.pallas_call(
                probe_kernel,
                out_shape=jax.ShapeDtypeStruct((rows, n), dtype),
            )(x)
            v = float(out[0, 0])
        if v == 1.0:
            mode = "neg"          # pltpu.roll matches jnp.roll
        elif v == float(n - 1):
            mode = "pos"          # reversed convention
    except Exception:
        mode = "concat"           # roll unavailable for this shape/dtype -> slice+concat
    _ROLL_MODE_CACHE[key] = mode
    return mode


def _lshift(x, k, mode):
    if k == 0:
        return x
    n = x.shape[-1]
    if mode == "neg":
        return pltpu.roll(x, n - k, axis=-1)
    if mode == "pos":
        return pltpu.roll(x, k, axis=-1)
    return _lshift_concat(x, k)


# ----------------------------------------------------------------------------
# Kernel
# ----------------------------------------------------------------------------
def dwtrans_kernel(x_ref, w_ref, o_ref, *, width, roll_mode, compute_dtype):
    """Refs (one grid step = block_n whole images):
      x_ref: (block_n, Cin, H*W)      channels on sublanes, pixels on lanes
      w_ref: (4*Cout, 4*Cin)          folded weight; rows=(a,b,cout), cols=(shift,cin)
      o_ref: (block_n, 4*Cout, H*W)   parity planes, f32, lane-dense stores
    """
    w = w_ref[...]
    nb = x_ref.shape[0]
    for m in range(nb):                                   # tiny static unroll over images
        x0 = x_ref[m].astype(compute_dtype)               # (Cin, HW)   x[i,   j]
        xd = _lshift(x0, width, roll_mode)                #             x[i+1, j]
        xr = _lshift(x0, 1, roll_mode)                    #             x[i,   j+1]
        xdr = _lshift(x0, width + 1, roll_mode)           #             x[i+1, j+1]
        # Stack the 4 shifted copies along the contraction dim -> one MXU matmul
        # produces all four output-parity planes for all Cout channels.
        x4 = jnp.concatenate([x0, xd, xr, xdr], axis=0)   # (4*Cin, HW)
        o_ref[m] = jnp.dot(w, x4, preferred_element_type=jnp.float32)


# ----------------------------------------------------------------------------
# Wrapper
# ----------------------------------------------------------------------------
def _fold_weights(w_dw, w_pw, compute_dtype):
    """Fold the 3x3 depthwise ConvTranspose taps into the 1x1 conv weight.

    Returns W4 of shape (4*Cout, 4*Cin):
      rows   : output parity (a, b) major, then Cout
      columns: shift s in [x, x(+row), x(+col), x(+row,+col)] major, then Cin
    """
    taps = w_dw[:, 0]                          # (Cin, 3, 3)
    wp = w_pw[:, :, 0, 0]                      # (Cout, Cin)
    zero = jnp.zeros_like(wp)

    def blk(kh, kw):                           # diag(taps[:, kh, kw]) folded into the 1x1
        return wp * taps[:, kh, kw][None, :]

    # ConvTranspose2d(k=3, s=2, p=1):  out[2i+a, 2j+b] = sum_s x_s * w[kh, kw]
    table = {
        (0, 0): {0: (1, 1)},
        (0, 1): {0: (1, 2), 2: (1, 0)},
        (1, 0): {0: (2, 1), 1: (0, 1)},
        (1, 1): {0: (2, 2), 1: (0, 2), 2: (2, 0), 3: (0, 0)},
    }
    rows = []
    for a in (0, 1):
        for b in (0, 1):
            m = table[(a, b)]
            rows.append(jnp.concatenate(
                [blk(*m[s]) if s in m else zero for s in range(4)], axis=1))
    return jnp.concatenate(rows, axis=0).astype(compute_dtype)      # (4*Cout, 4*Cin)


def dwtrans_forward(x_nchw, w_dw, w_pw, *, compute_dtype=jnp.bfloat16, block_n=None):
    """x_nchw: (N, Cin, H, W) f32; w_dw: (Cin, 1, 3, 3); w_pw: (Cout, Cin, 1, 1).
    Returns (N, Cout, 2H-1, 2W-1) f32, matching DwTrans(k=3, s=2, p=1, op=0)."""
    N, Cin, H, W = x_nchw.shape
    Cout = w_pw.shape[0]
    HW = H * W

    w4 = _fold_weights(w_dw, w_pw, compute_dtype)         # (4*Cout, 4*Cin)
    x3 = x_nchw.reshape(N, Cin, HW)                       # free: NCHW needs no transpose

    if block_n is None:                                   # whole images per grid step
        per_img_bytes = HW * (Cin * x_nchw.dtype.itemsize + 4 * Cout * 4)
        block_n = max(1, min(N, 8, (4 << 20) // max(per_img_bytes, 1)))
        while N % block_n:
            block_n -= 1

    roll_mode = _detect_roll_mode(Cin, HW, compute_dtype)

    kernel = functools.partial(dwtrans_kernel, width=W, roll_mode=roll_mode,
                               compute_dtype=compute_dtype)
    planes = pl.pallas_call(
        kernel,
        out_shape=jax.ShapeDtypeStruct((N, 4 * Cout, HW), jnp.float32),
        grid=(N // block_n,),
        in_specs=[
            pl.BlockSpec((block_n, Cin, HW), lambda n: (n, 0, 0)),
            pl.BlockSpec((4 * Cout, 4 * Cin), lambda n: (0, 0)),
        ],
        out_specs=pl.BlockSpec((block_n, 4 * Cout, HW), lambda n: (n, 0, 0)),
        compiler_params=pltpu.CompilerParams(dimension_semantics=("parallel",)),
    )(x3, w4)

    # Single fused XLA pass: (n, a, b, c, i, j) -> (n, c, i, a, j, b); merging (i,a) and
    # (j,b) is then a free reshape and the crop is a slice.
    y = planes.reshape(N, 2, 2, Cout, H, W).transpose(0, 3, 4, 1, 5, 2)
    y = y.reshape(N, Cout, 2 * H, 2 * W)[:, :, : 2 * H - 1, : 2 * W - 1]
    return y


# ----------------------------------------------------------------------------
# Pure-lax reference (matches nn.ConvTranspose2d(depthwise) + nn.Conv2d(1x1))
# ----------------------------------------------------------------------------
def dwtrans_ref(x_nchw, w_dw, w_pw, stride=2, padding=1, output_padding=0):
    K = w_dw.shape[-1]
    Cin = x_nchw.shape[1]
    w_flip = w_dw[:, :, ::-1, ::-1]
    lo = K - 1 - padding
    hi = K - 1 - padding + output_padding
    t = lax.conv_general_dilated(
        x_nchw, w_flip,
        window_strides=(1, 1),
        padding=[(lo, hi), (lo, hi)],
        lhs_dilation=(stride, stride),
        dimension_numbers=("NCHW", "OIHW", "NCHW"),
        feature_group_count=Cin)
    y = lax.conv_general_dilated(
        t, w_pw, window_strides=(1, 1), padding="VALID",
        dimension_numbers=("NCHW", "OIHW", "NCHW"))
    return y


if __name__ == "__main__":
    N, Cin, Cout, H, W = 2, 4, 8, 16, 16

    key = jax.random.PRNGKey(0)
    kx, kd, kp = jax.random.split(key, 3)
    x = jax.random.normal(kx, (N, Cin, H, W), jnp.float32)
    w_dw = 0.1 * jax.random.normal(kd, (Cin, 1, 3, 3), jnp.float32)    # ConvTranspose2d weight
    w_pw = 0.1 * jax.random.normal(kp, (Cout, Cin, 1, 1), jnp.float32)  # 1x1 Conv2d weight

    fwd = jax.jit(dwtrans_forward)
    y = jax.block_until_ready(fwd(x, w_dw, w_pw))

    y_ref = dwtrans_ref(x, w_dw, w_pw)
    assert y.shape == (N, Cout, 2 * H - 1, 2 * W - 1), y.shape
    # bf16 MXU operands with f32 accumulation -> loosened tolerance vs the f32 reference.
    np.testing.assert_allclose(np.asarray(y, dtype=np.float32),
                               np.asarray(y_ref, dtype=np.float32),
                               rtol=5e-2, atol=5e-3)
    print("KERNEL_OK")
</pallas_src>

<mosaic_0001>
module attributes {stable_mosaic.version = 11 : i64} {
  func.func @dwtrans_kernel(%arg0: i32, %arg1: memref<2x4x256xf32, #tpu.memory_space<vmem>>, %arg2: memref<32x16xbf16, #tpu.memory_space<vmem>>, %arg3: memref<2x32x256xf32, #tpu.memory_space<vmem>>) attributes {dimension_semantics = [#tpu.dimension_semantics<parallel>], iteration_bounds = array<i64: 1>, scalar_prefetch = 0 : i64, scratch_operands = 0 : i64, tpu.core_type = #tpu.core_type<tc>, window_params = [{transform_indices = @transform_0, window_bounds = array<i64: 2, 4, 256>}, {pipeline_mode = #tpu.pipeline_mode<synchronous>, transform_indices = @transform_1, window_bounds = array<i64: 32, 16>}, {transform_indices = @transform_2, window_bounds = array<i64: 2, 32, 256>}]} {
    %c0 = arith.constant 0 : index
    %c0_0 = arith.constant 0 : index
    %0 = vector.load %arg2[%c0, %c0_0] : memref<32x16xbf16, #tpu.memory_space<vmem>>, vector<32x16xbf16>
    %c0_1 = arith.constant 0 : index
    %c0_2 = arith.constant 0 : index
    %c0_3 = arith.constant 0 : index
    %1 = vector.load %arg1[%c0_1, %c0_2, %c0_3] : memref<2x4x256xf32, #tpu.memory_space<vmem>>, vector<1x4x256xf32>
    %2 = vector.shape_cast %1 : vector<1x4x256xf32> to vector<4x256xf32>
    %3 = arith.truncf %2 : vector<4x256xf32> to vector<4x256xbf16>
    %4 = vector.extract_strided_slice %3 {offsets = [0, 16], sizes = [4, 240], strides = [1, 1]} : vector<4x256xbf16> to vector<4x240xbf16>
    %5 = vector.extract_strided_slice %3 {offsets = [0, 0], sizes = [4, 16], strides = [1, 1]} : vector<4x256xbf16> to vector<4x16xbf16>
    %6 = tpu.concatenate %4, %5 in 1 : vector<4x240xbf16>, vector<4x16xbf16> -> vector<4x256xbf16>
    %7 = vector.extract_strided_slice %3 {offsets = [0, 1], sizes = [4, 255], strides = [1, 1]} : vector<4x256xbf16> to vector<4x255xbf16>
    %8 = vector.extract_strided_slice %3 {offsets = [0, 0], sizes = [4, 1], strides = [1, 1]} : vector<4x256xbf16> to vector<4x1xbf16>
    %9 = tpu.concatenate %7, %8 in 1 : vector<4x255xbf16>, vector<4x1xbf16> -> vector<4x256xbf16>
    %10 = vector.extract_strided_slice %3 {offsets = [0, 17], sizes = [4, 239], strides = [1, 1]} : vector<4x256xbf16> to vector<4x239xbf16>
    %11 = vector.extract_strided_slice %3 {offsets = [0, 0], sizes = [4, 17], strides = [1, 1]} : vector<4x256xbf16> to vector<4x17xbf16>
    %12 = tpu.concatenate %10, %11 in 1 : vector<4x239xbf16>, vector<4x17xbf16> -> vector<4x256xbf16>
    %13 = tpu.concatenate %3, %6, %9, %12 in 0 : vector<4x256xbf16>, vector<4x256xbf16>, vector<4x256xbf16>, vector<4x256xbf16> -> vector<16x256xbf16>
    %cst = arith.constant dense<0.000000e+00> : vector<32x256xf32>
    %14 = tpu.matmul %0, %13, %cst {dimension_numbers = #tpu.dot_dimension_numbers<[1], [0], [0], [1], [0, 0, 1, 1], [], []>} : vector<32x16xbf16>, vector<16x256xbf16>, vector<32x256xf32> -> vector<32x256xf32>
    %c0_4 = arith.constant 0 : index
    %c0_5 = arith.constant 0 : index
    %c0_6 = arith.constant 0 : index
    %15 = vector.load %arg3[%c0_4, %c0_5, %c0_6] : memref<2x32x256xf32, #tpu.memory_space<vmem>>, vector<1x32x256xf32>
    %16 = vector.shape_cast %15 : vector<1x32x256xf32> to vector<32x256xf32>
    %17 = vector.shape_cast %14 : vector<32x256xf32> to vector<1x32x256xf32>
    tpu.vector_store %arg3[%c0_4, %c0_5, %c0_6], %17 {strides = array<i32>} : memref<2x32x256xf32, #tpu.memory_space<vmem>>, vector<1x32x256xf32>,
    %c1 = arith.constant 1 : index
    %c0_7 = arith.constant 0 : index
    %c0_8 = arith.constant 0 : index
    %18 = vector.load %arg1[%c1, %c0_7, %c0_8] : memref<2x4x256xf32, #tpu.memory_space<vmem>>, vector<1x4x256xf32>
    %19 = vector.shape_cast %18 : vector<1x4x256xf32> to vector<4x256xf32>
    %20 = arith.truncf %19 : vector<4x256xf32> to vector<4x256xbf16>
    %21 = vector.extract_strided_slice %20 {offsets = [0, 16], sizes = [4, 240], strides = [1, 1]} : vector<4x256xbf16> to vector<4x240xbf16>
    %22 = vector.extract_strided_slice %20 {offsets = [0, 0], sizes = [4, 16], strides = [1, 1]} : vector<4x256xbf16> to vector<4x16xbf16>
    %23 = tpu.concatenate %21, %22 in 1 : vector<4x240xbf16>, vector<4x16xbf16> -> vector<4x256xbf16>
    %24 = vector.extract_strided_slice %20 {offsets = [0, 1], sizes = [4, 255], strides = [1, 1]} : vector<4x256xbf16> to vector<4x255xbf16>
    %25 = vector.extract_strided_slice %20 {offsets = [0, 0], sizes = [4, 1], strides = [1, 1]} : vector<4x256xbf16> to vector<4x1xbf16>
    %26 = tpu.concatenate %24, %25 in 1 : vector<4x255xbf16>, vector<4x1xbf16> -> vector<4x256xbf16>
    %27 = vector.extract_strided_slice %20 {offsets = [0, 17], sizes = [4, 239], strides = [1, 1]} : vector<4x256xbf16> to vector<4x239xbf16>
    %28 = vector.extract_strided_slice %20 {offsets = [0, 0], sizes = [4, 17], strides = [1, 1]} : vector<4x256xbf16> to vector<4x17xbf16>
    %29 = tpu.concatenate %27, %28 in 1 : vector<4x239xbf16>, vector<4x17xbf16> -> vector<4x256xbf16>
    %30 = tpu.concatenate %20, %23, %26, %29 in 0 : vector<4x256xbf16>, vector<4x256xbf16>, vector<4x256xbf16>, vector<4x256xbf16> -> vector<16x256xbf16>
    %cst_9 = arith.constant dense<0.000000e+00> : vector<32x256xf32>
    %31 = tpu.matmul %0, %30, %cst_9 {dimension_numbers = #tpu.dot_dimension_numbers<[1], [0], [0], [1], [0, 0, 1, 1], [], []>} : vector<32x16xbf16>, vector<16x256xbf16>, vector<32x256xf32> -> vector<32x256xf32>
    %c1_10 = arith.constant 1 : index
    %c0_11 = arith.constant 0 : index
    %c0_12 = arith.constant 0 : index
    %32 = vector.load %arg3[%c1_10, %c0_11, %c0_12] : memref<2x32x256xf32, #tpu.memory_space<vmem>>, vector<1x32x256xf32>
    %33 = vector.shape_cast %32 : vector<1x32x256xf32> to vector<32x256xf32>
    %34 = vector.shape_cast %31 : vector<32x256xf32> to vector<1x32x256xf32>
    tpu.vector_store %arg3[%c1_10, %c0_11, %c0_12], %34 {strides = array<i32>} : memref<2x32x256xf32, #tpu.memory_space<vmem>>, vector<1x32x256xf32>,
    return
  }
  func.func @transform_0(%arg0: i32) -> (i32, i32, i32) {
    %c0_i32 = arith.constant 0 : i32
    %c0_i32_0 = arith.constant 0 : i32
    %c0_i32_1 = arith.constant 0 : i32
    return %arg0, %c0_i32, %c0_i32_0 : i32, i32, i32
  }
  func.func @transform_1(%arg0: i32) -> (i32, i32) {
    %c0_i32 = arith.constant 0 : i32
    %c0_i32_0 = arith.constant 0 : i32
    %c0_i32_1 = arith.constant 0 : i32
    return %c0_i32, %c0_i32_0 : i32, i32
  }
  func.func @transform_2(%arg0: i32) -> (i32, i32, i32) {
    %c0_i32 = arith.constant 0 : i32
    %c0_i32_0 = arith.constant 0 : i32
    %c0_i32_1 = arith.constant 0 : i32
    return %arg0, %c0_i32, %c0_i32_0 : i32, i32, i32
  }
}

</mosaic_0001>

<llo_original>
// kernel: dwtrans_forward.1
$region0: #{dwtrans_forward.1}
  #allocation0 [shape = 'u32[]', space=smem, size = 0x4, offset = 0x4, fixed_abs, tag = 'smem constant byte address 0x4 - core index']
  #allocation1 [shape = 'u32[144,128]{1,0:T(1,128)}', space=vmem, size = 0x12000, scoped, tag = 'internal scratch']
  %s0 = inlined_call_operand.vmem [shape: f32[2,4,256], index: 0, kind: input, shape index: {}]
  %s1 = inlined_call_operand.vmem [shape: bf16[32,16], index: 1, kind: input, shape index: {}]
  %s2 = inlined_call_operand.vmem [shape: f32[2,32,256], index: 2, kind: output, shape index: {}]
  %s3 = sld [smem:[#allocation0]]
  $region18: #{dwtrans_forward.1} parent=0
    _
  %s5 = ssub.s32 1, %s3
  %s6 = scalar_select 0, %s5, %s3
  // Predicated region
  $region2: #{dwtrans_forward.1} parent=0 // pred_check
    _
  $region3: #{dwtrans_forward.1} parent=0 // pred_check_branch
    %8 = sbr.rel (0) target = $region5
  $region4: #{dwtrans_forward.1} parent=0 // pred_region
    _
  $region5: #{dwtrans_forward.1} parent=0 // pred_fallthru
    _
  // Predicated region
  $region6: #{dwtrans_forward.1} parent=0 // pred_check
    _
  $region7: #{dwtrans_forward.1} parent=0 // pred_check_branch
    %10 = sbr.rel (0) target = $region9
  $region8: #{dwtrans_forward.1} parent=0 // pred_region
    _
  $region9: #{dwtrans_forward.1} parent=0 // pred_fallthru
    _
  %v12 = vld [vmem:[%s1] sm:$0xf]
  %v13 = vld [vmem:[%s1 + $0x4] sm:$0xf]
  %v14 = vld [vmem:[%s1 + $0x8] sm:$0xf]
  %v15 = vld [vmem:[%s1 + $0xc] sm:$0xf]
  %v16 = vld [vmem:[%s0] sm:$0xff]
  %v18 = vcombine.high %v16, %v16
  %v20 = vpack.c.bf16 %v16, %v16
  %v21 = vpack.c.bf16 %v18, %v18
  %24 = vrot.lane.b32.xlu0 %v20, 112
  %v25 = vpop.permute.xlu0 %24
  %26 = vrot.lane.b32.xlu0 %v21, 112
  %v27 = vpop.permute.xlu0 %26
  %vm28 = vcmask 916480
  %v29 = vsel %vm28, %v25, %v27
  %vm30 = vcmask 916480
  %v33 = vsel %vm30, %v27, %v25
  %34 = vrot.lane.b32.xlu0 %v20, 127
  %v35 = vpop.permute.xlu0 %34
  %36 = vrot.lane.b32.xlu0 %v21, 127
  %v37 = vpop.permute.xlu0 %36
  %vm38 = vcmask 1039360
  %v39 = vsel %vm38, %v35, %v37
  %vm40 = vcmask 1039360
  %v43 = vsel %vm40, %v37, %v35
  %44 = vrot.lane.b32.xlu0 %v20, 111
  %v45 = vpop.permute.xlu0 %44
  %46 = vrot.lane.b32.xlu0 %v21, 111
  %v47 = vpop.permute.xlu0 %46
  %vm48 = vcmask 908288
  %v49 = vsel %vm48, %v45, %v47
  %vm50 = vcmask 908288
  %v53 = vsel %vm50, %v47, %v45
  %v55 = vrot.slane %v29, 6
  %v56 = vrot.slane %v33, 6
  %v58 = vrot.slane %v39, 4
  %v59 = vrot.slane %v43, 4
  %v61 = vrot.slane %v49, 2
  %v62 = vrot.slane %v53, 2
  %vm63 = vcmask 1041408
  %v66 = vsel %vm63, %v20, %v55
  %v69 = vsel %vm63, %v21, %v56
  %vm70 = vcmask 1043456
  %v72 = vsel %vm70, %v66, %v58
  %v74 = vsel %vm70, %v69, %v59
  %vm75 = vcmask 1045504
  %v77 = vsel %vm75, %v72, %v61
  %v80 = vsel %vm75, %v74, %v62
  %v86 = vunpack.c.l.b16 %v12
  %v87 = vunpack.c.l.b16 %v13
  %v88 = vunpack.c.l.b16 %v14
  %v89 = vunpack.c.l.b16 %v15
  %v90 = vpack.c.b16 %v87, %v86
  %v91 = vpack.c.b16 %v89, %v88
  %vm92 = vcmask 130048
  %v94 = vsel %vm92, %v90, 0
  %v97 = vsel %vm92, %v91, 0
  %99 = vmatprep.subr.bf16.mxu0 0
  %100 = vmatpush1.bf16.msra.mxu0 0
  %101 = vmatprep.subr.bf16.mxu0 0
  %102 = vmatpush1.bf16.msra.mxu0 0
  %103 = vmatprep.subr.bf16.mxu0 0
  %104 = vmatpush1.bf16.msra.mxu0 0
  %105 = vmatprep.subr.bf16.mxu0 0
  %106 = vmatpush1.bf16.msra.mxu0 0
  %107 = vmatprep.subr.bf16.mxu0 0
  %108 = vmatpush1.bf16.msra.mxu0 0
  %109 = vmatprep.subr.bf16.mxu0 0
  %110 = vmatpush1.bf16.msra.mxu0 0
  %111 = vmatprep.subr.bf16.mxu0 0
  %112 = vmatpush1.bf16.msra.mxu0 0
  %113 = vmatprep.subr.bf16.mxu0 %v80
  %114 = vmatpush1.bf16.msra.mxu0 %v77
  %115 = vmatprep.subr.bf16.mxu0 0
  %116 = vmatpush2.bf16.msra.mxu0 0
  %117 = vmatprep.subr.bf16.mxu0 0
  %118 = vmatpush2.bf16.msra.mxu0 0
  %119 = vmatprep.subr.bf16.mxu0 0
  %120 = vmatpush2.bf16.msra.mxu0 0
  %121 = vmatprep.subr.bf16.mxu0 0
  %122 = vmatpush2.bf16.msra.mxu0 0
  %123 = vmatprep.subr.bf16.mxu0 0
  %124 = vmatpush2.bf16.msra.mxu0 0
  %125 = vmatprep.subr.bf16.mxu0 0
  %126 = vmatpush2.bf16.msra.mxu0 0
  %127 = vmatprep.subr.bf16.mxu0 0
  %128 = vmatpush2.bf16.msra.mxu0 0
  %129 = vmatprep.subr.bf16.mxu0 0
  %130 = vmatpush2.bf16.msra.mxu0 0
  %131 = vmatprep.mubr.bf16.mxu0 0
  %132 = vmatmul.mubr.bf16.gmra.mxu0 %v94
  %v133 = vpop.f32.mrf.mxu0
  %v134 = vadd.f32 0.0, %v133
  %v135 = vpop.f32.mrf.mxu0
  %v136 = vadd.f32 0.0, %v135
  %v137 = vpop.f32.mrf.mxu0
  %v138 = vadd.f32 0.0, %v137
  %v139 = vpop.f32.mrf.mxu0
  %v140 = vadd.f32 0.0, %v139
  %141 = vmatprep.mubr.bf16.mxu0 0
  %142 = vmatmul.mubr.bf16.gmra.mxu0 %v97
  %v143 = vpop.f32.mrf.mxu0
  %v144 = vadd.f32 0.0, %v143
  %v145 = vpop.f32.mrf.mxu0
  %v146 = vadd.f32 0.0, %v145
  %v147 = vpop.f32.mrf.mxu0
  %v148 = vadd.f32 0.0, %v147
  %v149 = vpop.f32.mrf.mxu0
  %v150 = vadd.f32 0.0, %v149
  %151 = vdwg.mxu0
  %152 = vst [vmem:[%s2] sm:$0xff] %v134
  %153 = vst [vmem:[%s2 + $0x8] sm:$0xff] %v136
  %154 = vst [vmem:[%s2 + $0x10] sm:$0xff] %v138
  %155 = vst [vmem:[%s2 + $0x18] sm:$0xff] %v140
  %156 = vst [vmem:[%s2 + $0x20] sm:$0xff] %v144
  %157 = vst [vmem:[%s2 + $0x28] sm:$0xff] %v146
  %158 = vst [vmem:[%s2 + $0x30] sm:$0xff] %v148
  %159 = vst [vmem:[%s2 + $0x38] sm:$0xff] %v150
  %s160 = scalar_lea.vmem %s0, 8
  %v161 = vld [vmem:[%s160] sm:$0xff]
  %v163 = vcombine.high %v161, %v161
  %v165 = vpack.c.bf16 %v161, %v161
  %v166 = vpack.c.bf16 %v163, %v163
  %169 = vrot.lane.b32.xlu0 %v165, 112
  %v170 = vpop.permute.xlu0 %169
  %171 = vrot.lane.b32.xlu0 %v166, 112
  %v172 = vpop.permute.xlu0 %171
  %v173 = vsel %vm28, %v170, %v172
  %v176 = vsel %vm30, %v172, %v170
  %177 = vrot.lane.b32.xlu0 %v165, 127
  %v178 = vpop.permute.xlu0 %177
  %179 = vrot.lane.b32.xlu0 %v166, 127
  %v180 = vpop.permute.xlu0 %179
  %v181 = vsel %vm38, %v178, %v180
  %v184 = vsel %vm40, %v180, %v178
  %185 = vrot.lane.b32.xlu0 %v165, 111
  %v186 = vpop.permute.xlu0 %185
  %187 = vrot.lane.b32.xlu0 %v166, 111
  %v188 = vpop.permute.xlu0 %187
  %v189 = vsel %vm48, %v186, %v188
  %v192 = vsel %vm50, %v188, %v186
  %v194 = vrot.slane %v173, 6
  %v195 = vrot.slane %v176, 6
  %v197 = vrot.slane %v181, 4
  %v198 = vrot.slane %v184, 4
  %v200 = vrot.slane %v189, 2
  %v201 = vrot.slane %v192, 2
  %v204 = vsel %vm63, %v165, %v194
  %v207 = vsel %vm63, %v166, %v195
  %v209 = vsel %vm70, %v204, %v197
  %v211 = vsel %vm70, %v207, %v198
  %v213 = vsel %vm75, %v209, %v200
  %v216 = vsel %vm75, %v211, %v201
  %218 = vmatprep.subr.bf16.mxu0 0
  %219 = vmatpush1.bf16.msra.mxu0 0
  %220 = vmatprep.subr.bf16.mxu0 0
  %221 = vmatpush1.bf16.msra.mxu0 0
  %222 = vmatprep.subr.bf16.mxu0 0
  %223 = vmatpush1.bf16.msra.mxu0 0
  %224 = vmatprep.subr.bf16.mxu0 0
  %225 = vmatpush1.bf16.msra.mxu0 0
  %226 = vmatprep.subr.bf16.mxu0 0
  %227 = vmatpush1.bf16.msra.mxu0 0
  %228 = vmatprep.subr.bf16.mxu0 0
  %229 = vmatpush1.bf16.msra.mxu0 0
  %230 = vmatprep.subr.bf16.mxu0 0
  %231 = vmatpush1.bf16.msra.mxu0 0
  %232 = vmatprep.subr.bf16.mxu0 %v216
  %233 = vmatpush1.bf16.msra.mxu0 %v213
  %234 = vmatprep.subr.bf16.mxu0 0
  %235 = vmatpush2.bf16.msra.mxu0 0
  %236 = vmatprep.subr.bf16.mxu0 0
  %237 = vmatpush2.bf16.msra.mxu0 0
  %238 = vmatprep.subr.bf16.mxu0 0
  %239 = vmatpush2.bf16.msra.mxu0 0
  %240 = vmatprep.subr.bf16.mxu0 0
  %241 = vmatpush2.bf16.msra.mxu0 0
  %242 = vmatprep.subr.bf16.mxu0 0
  %243 = vmatpush2.bf16.msra.mxu0 0
  %244 = vmatprep.subr.bf16.mxu0 0
  %245 = vmatpush2.bf16.msra.mxu0 0
  %246 = vmatprep.subr.bf16.mxu0 0
  %247 = vmatpush2.bf16.msra.mxu0 0
  %248 = vmatprep.subr.bf16.mxu0 0
  %249 = vmatpush2.bf16.msra.mxu0 0
  %250 = vmatprep.mubr.bf16.mxu0 0
  %251 = vmatmul.mubr.bf16.gmra.mxu0 %v94
  %v252 = vpop.f32.mrf.mxu0
  %v253 = vadd.f32 0.0, %v252
  %v254 = vpop.f32.mrf.mxu0
  %v255 = vadd.f32 0.0, %v254
  %v256 = vpop.f32.mrf.mxu0
  %v257 = vadd.f32 0.0, %v256
  %v258 = vpop.f32.mrf.mxu0
  %v259 = vadd.f32 0.0, %v258
  %260 = vmatprep.mubr.bf16.mxu0 0
  %261 = vmatmul.mubr.bf16.gmra.mxu0 %v97
  %v262 = vpop.f32.mrf.mxu0
  %v263 = vadd.f32 0.0, %v262
  %v264 = vpop.f32.mrf.mxu0
  %v265 = vadd.f32 0.0, %v264
  %v266 = vpop.f32.mrf.mxu0
  %v267 = vadd.f32 0.0, %v266
  %v268 = vpop.f32.mrf.mxu0
  %v269 = vadd.f32 0.0, %v268
  %270 = vdwg.mxu0
  %s271 = scalar_lea.vmem %s2, 64
  %272 = vst [vmem:[%s271] sm:$0xff] %v253
  %273 = vst [vmem:[%s271 + $0x8] sm:$0xff] %v255
  %274 = vst [vmem:[%s271 + $0x10] sm:$0xff] %v257
  %275 = vst [vmem:[%s271 + $0x18] sm:$0xff] %v259
  %276 = vst [vmem:[%s271 + $0x20] sm:$0xff] %v263
  %277 = vst [vmem:[%s271 + $0x28] sm:$0xff] %v265
  %278 = vst [vmem:[%s271 + $0x30] sm:$0xff] %v267
  %279 = vst [vmem:[%s271 + $0x38] sm:$0xff] %v269
  // Predicated region
  $region10: #{dwtrans_forward.1} parent=0 // pred_check
    _
  $region11: #{dwtrans_forward.1} parent=0 // pred_check_branch
    %281 = sbr.rel (0) target = $region13
  $region12: #{dwtrans_forward.1} parent=0 // pred_region
    _
  $region13: #{dwtrans_forward.1} parent=0 // pred_fallthru
    _
  // Predicated region
  $region14: #{dwtrans_forward.1} parent=0 // pred_check
    _
  $region15: #{dwtrans_forward.1} parent=0 // pred_check_branch
    %283 = sbr.rel (0) target = $region17
  $region16: #{dwtrans_forward.1} parent=0 // pred_region
    _
  $region17: #{dwtrans_forward.1} parent=0 // pred_fallthru
    _

</llo_original>
